<compile_context>
chip_gen: v5e
topology: v5e:2x2
jax: 0.10.0
libtpu: 0.0.40
codegen_flags: <defaults>
</compile_context>

<pallas_src>
import functools
import math

import jax
import jax.numpy as jnp
from jax.experimental import pallas as pl
from jax.experimental.pallas import tpu as pltpu


def _round_up(x, m):
    return ((x + m - 1) // m) * m


def _physical_vmem_bytes():
    # Trace-time hardware query; fall back to the smallest per-TC VMEM (v7x).
    try:
        return int(pltpu.get_tpu_info().vmem_capacity_bytes)
    except Exception:
        return 64 << 20


def _layernorm_kernel(x_ref, a_ref, b_ref, o_ref, *, eps, features):
    # x_ref: (block_rows, features); a_ref/b_ref: (1, features)
    x = x_ref[...].astype(jnp.float32)
    mean = jnp.mean(x, axis=-1, keepdims=True)
    diff = x - mean
    # torch.std default: unbiased (divide by N-1). Guard the Python-level
    # division for features == 1 (torch would produce NaN there).
    inv_nm1 = jnp.float32(1.0 / max(features - 1, 1))
    var = jnp.sum(diff * diff, axis=-1, keepdims=True) * inv_nm1
    std = jnp.sqrt(var)
    n = a_ref[...].astype(jnp.float32) * diff
    d = std + jnp.float32(eps) + b_ref[...].astype(jnp.float32)
    # Full-tile reciprocal on the EUP (exact), multiply on the VPU.
    inv = pl.reciprocal(d, approx=False)
    o_ref[...] = (n * inv).astype(o_ref.dtype)


def _choose_block_rows(rows, features, itemsize, target_io_bytes,
                       vmem_budget_bytes, min_grid_steps):
    # Sub-32-bit dtypes pack along sublanes: f32 -> 8, bf16 -> 16, int8 -> 32.
    sublane = 8 * max(1, 4 // itemsize)
    # HBM traffic per row per grid step: read + write in the I/O dtype.
    io_row_bytes = 2 * features * itemsize
    # f32 working copy when the kernel upcasts (bf16 / int8 inputs).
    work_row_bytes = features * 4 if itemsize < 4 else 0
    # VMEM per row: double-buffered input + output tiles + working copy.
    vmem_row_bytes = 2 * io_row_bytes + work_row_bytes

    rows_by_target = max(sublane, target_io_bytes // io_row_bytes)
    rows_by_vmem = max(sublane, vmem_budget_bytes // vmem_row_bytes)
    # Keep at least `min_grid_steps` grid steps so v7x's two TCs both get work.
    rows_by_split = _round_up(pl.cdiv(rows, min_grid_steps), sublane)

    block_rows = min(rows_by_target, rows_by_vmem, rows_by_split,
                     _round_up(rows, sublane))
    block_rows = max(sublane, (block_rows // sublane) * sublane)
    return block_rows


def layer_norm(x, a_2, b_2, eps=1e-6, block_rows=None,
               target_io_bytes=8 << 20, min_grid_steps=2):
    """x: (..., features). a_2, b_2: (features,). Matches the PyTorch module."""
    # TODO(synk): hidden sizes that are not a multiple of 128 use masked lane
    # stores (vst.msk); production BERT hiddens (768/1024/...) are lane-dense.
    orig_shape = x.shape
    features = orig_shape[-1]
    rows = math.prod(orig_shape[:-1]) if len(orig_shape) > 1 else 1
    itemsize = jnp.dtype(x.dtype).itemsize

    physical_vmem = _physical_vmem_bytes()
    vmem_budget = physical_vmem // 4  # 16 MiB on v7x, 32 MiB on v5e/v6e

    if block_rows is None:
        block_rows = _choose_block_rows(rows, features, itemsize,
                                        target_io_bytes, vmem_budget,
                                        min_grid_steps)

    x2 = x.reshape(rows, features)
    a2 = a_2.reshape(1, features)
    b2 = b_2.reshape(1, features)

    # Ragged last block handled by Pallas (bounded DMAs) — no jnp.pad copy.
    grid = (pl.cdiv(rows, block_rows),)

    # Explicit VMEM budget: double-buffered in+out tiles (+ f32 working tile
    # for narrow dtypes) + params + slack, capped at half the physical per-TC
    # VMEM so v7x (64 MiB) keeps headroom and v5e never falls back to the tiny
    # 16 MiB scoped default.
    tile_bytes = block_rows * features * itemsize
    work_bytes = block_rows * features * 4 if itemsize < 4 else 0
    footprint = 4 * tile_bytes + work_bytes + 4 * features * 4 + (1 << 20)
    vmem_limit = int(min(max(footprint + (8 << 20), 32 << 20),
                         physical_vmem // 2))

    kernel = functools.partial(_layernorm_kernel, eps=eps, features=features)

    out = pl.pallas_call(
        kernel,
        out_shape=jax.ShapeDtypeStruct((rows, features), x.dtype),
        grid_spec=pltpu.PrefetchScalarGridSpec(
            num_scalar_prefetch=0,
            grid=grid,
            in_specs=[
                pl.BlockSpec((block_rows, features), lambda i: (i, 0)),
                pl.BlockSpec((1, features), lambda i: (0, 0)),
                pl.BlockSpec((1, features), lambda i: (0, 0)),
            ],
            out_specs=pl.BlockSpec((block_rows, features), lambda i: (i, 0)),
        ),
        compiler_params=pltpu.CompilerParams(
            dimension_semantics=("parallel",),
            vmem_limit_bytes=vmem_limit,
        ),
    )(x2, a2, b2)

    return out.reshape(orig_shape)


def _reference(x, a_2, b_2, eps):
    features = x.shape[-1]
    xf = x.astype(jnp.float32)
    mean = jnp.mean(xf, axis=-1, keepdims=True)
    std = jnp.sqrt(jnp.sum((xf - mean) ** 2, axis=-1, keepdims=True)
                   / max(features - 1, 1))
    out = (a_2.astype(jnp.float32) * (xf - mean)) / (std + eps
                                                     + b_2.astype(jnp.float32))
    return out.astype(x.dtype)


if __name__ == "__main__":
    key = jax.random.PRNGKey(0)
    eps = 1e-6

    # Case 1: small BERT-like shape (batch=2, seq=8, hidden=32).
    batch, seq, hidden = 2, 8, 32
    k1, k2, k3, k4 = jax.random.split(key, 4)
    x = jax.random.normal(k1, (batch, seq, hidden), dtype=jnp.float32)
    a_2 = 1.0 + 0.1 * jax.random.normal(k3, (hidden,), dtype=jnp.float32)
    b_2 = 0.05 * jax.random.uniform(k4, (hidden,), dtype=jnp.float32)

    out = jax.block_until_ready(layer_norm(x, a_2, b_2, eps=eps))
    ref = _reference(x, a_2, b_2, eps)
    assert jnp.allclose(out, ref, atol=1e-5, rtol=1e-5), "mismatch (case 1)"

    # Case 2: ragged row count (rows=15 not divisible by block_rows) with a
    # lane-dense hidden; exercises the padding-free partial-block path.
    batch2, seq2, hidden2 = 3, 5, 128
    x2 = jax.random.normal(k2, (batch2, seq2, hidden2), dtype=jnp.float32)
    a_22 = jnp.ones((hidden2,), dtype=jnp.float32)
    b_22 = jnp.zeros((hidden2,), dtype=jnp.float32)

    out2 = jax.block_until_ready(layer_norm(x2, a_22, b_22, eps=eps))
    ref2 = _reference(x2, a_22, b_22, eps)
    assert jnp.allclose(out2, ref2, atol=1e-5, rtol=1e-5), "mismatch (case 2)"

    print("KERNEL_OK")
</pallas_src>

<mosaic_0001>
module attributes {stable_mosaic.version = 11 : i64} {
  func.func @_layernorm_kernel(%arg0: i32, %arg1: memref<8x32xf32, #tpu.memory_space<vmem>>, %arg2: memref<1x32xf32, #tpu.memory_space<vmem>>, %arg3: memref<1x32xf32, #tpu.memory_space<vmem>>, %arg4: memref<8x32xf32, #tpu.memory_space<vmem>>) attributes {dimension_semantics = [#tpu.dimension_semantics<parallel>], iteration_bounds = array<i64: 2>, scalar_prefetch = 0 : i64, scratch_operands = 0 : i64, tpu.core_type = #tpu.core_type<tc>, window_params = [{transform_indices = @transform_0, window_bounds = array<i64: 8, 32>}, {pipeline_mode = #tpu.pipeline_mode<synchronous>, transform_indices = @transform_1, window_bounds = array<i64: 1, 32>}, {pipeline_mode = #tpu.pipeline_mode<synchronous>, transform_indices = @transform_2, window_bounds = array<i64: 1, 32>}, {transform_indices = @transform_3, window_bounds = array<i64: 8, 32>}]} {
    %c0 = arith.constant 0 : index
    %c0_0 = arith.constant 0 : index
    %0 = vector.load %arg1[%c0, %c0_0] : memref<8x32xf32, #tpu.memory_space<vmem>>, vector<8x32xf32>
    %cst = arith.constant dense<0.000000e+00> : vector<8xf32>
    %1 = vector.multi_reduction <add>, %0, %cst [1] : vector<8x32xf32> to vector<8xf32>
    %2 = vector.shape_cast %1 : vector<8xf32> to vector<8x1xf32>
    %cst_1 = arith.constant 3.200000e+01 : f32
    %3 = vector.broadcast %cst_1 : f32 to vector<8x1xf32>
    %4 = arith.divf %2, %3 : vector<8x1xf32>
    %5 = vector.broadcast %4 : vector<8x1xf32> to vector<8x32xf32>
    %6 = arith.subf %0, %5 : vector<8x32xf32>
    %7 = arith.mulf %6, %6 : vector<8x32xf32>
    %cst_2 = arith.constant dense<0.000000e+00> : vector<8xf32>
    %8 = vector.multi_reduction <add>, %7, %cst_2 [1] : vector<8x32xf32> to vector<8xf32>
    %9 = vector.shape_cast %8 : vector<8xf32> to vector<8x1xf32>
    %cst_3 = arith.constant 0.0322580636 : f32
    %10 = vector.broadcast %cst_3 : f32 to vector<8x1xf32>
    %11 = arith.mulf %9, %10 : vector<8x1xf32>
    %12 = math.sqrt %11 : vector<8x1xf32>
    %c0_4 = arith.constant 0 : index
    %c0_5 = arith.constant 0 : index
    %13 = vector.load %arg2[%c0_4, %c0_5] : memref<1x32xf32, #tpu.memory_space<vmem>>, vector<1x32xf32>
    %14 = vector.broadcast %13 : vector<1x32xf32> to vector<8x32xf32>
    %15 = arith.mulf %14, %6 : vector<8x32xf32>
    %cst_6 = arith.constant 9.99999997E-7 : f32
    %16 = vector.broadcast %cst_6 : f32 to vector<8x1xf32>
    %17 = arith.addf %12, %16 : vector<8x1xf32>
    %c0_7 = arith.constant 0 : index
    %c0_8 = arith.constant 0 : index
    %18 = vector.load %arg3[%c0_7, %c0_8] : memref<1x32xf32, #tpu.memory_space<vmem>>, vector<1x32xf32>
    %19 = vector.broadcast %17 : vector<8x1xf32> to vector<8x32xf32>
    %20 = vector.broadcast %18 : vector<1x32xf32> to vector<8x32xf32>
    %21 = arith.addf %19, %20 : vector<8x32xf32>
    %22 = tpu.reciprocal %21 : vector<8x32xf32> -> vector<8x32xf32>
    %23 = arith.mulf %15, %22 : vector<8x32xf32>
    %c0_9 = arith.constant 0 : index
    %c0_10 = arith.constant 0 : index
    %24 = vector.load %arg4[%c0_9, %c0_10] : memref<8x32xf32, #tpu.memory_space<vmem>>, vector<8x32xf32>
    tpu.vector_store %arg4[%c0_9, %c0_10], %23 {strides = array<i32>} : memref<8x32xf32, #tpu.memory_space<vmem>>, vector<8x32xf32>,
    return
  }
  func.func @transform_0(%arg0: i32) -> (i32, i32) {
    %c0_i32 = arith.constant 0 : i32
    %c0_i32_0 = arith.constant 0 : i32
    return %arg0, %c0_i32 : i32, i32
  }
  func.func @transform_1(%arg0: i32) -> (i32, i32) {
    %c0_i32 = arith.constant 0 : i32
    %c0_i32_0 = arith.constant 0 : i32
    %c0_i32_1 = arith.constant 0 : i32
    return %c0_i32, %c0_i32_0 : i32, i32
  }
  func.func @transform_2(%arg0: i32) -> (i32, i32) {
    %c0_i32 = arith.constant 0 : i32
    %c0_i32_0 = arith.constant 0 : i32
    %c0_i32_1 = arith.constant 0 : i32
    return %c0_i32, %c0_i32_0 : i32, i32
  }
  func.func @transform_3(%arg0: i32) -> (i32, i32) {
    %c0_i32 = arith.constant 0 : i32
    %c0_i32_0 = arith.constant 0 : i32
    return %arg0, %c0_i32 : i32, i32
  }
}

</mosaic_0001>

<llo_original>
// kernel: tpu_custom_call.1
$region0: #{tpu_custom_call.1}
  #allocation0 [shape = 'u32[]', space=smem, size = 0x4, offset = 0x4, fixed_abs, tag = 'smem constant byte address 0x4 - core index']
  #allocation1 [shape = 'u32[72,128]{1,0:T(1,128)}', space=vmem, size = 0x9000, scoped, tag = 'internal scratch']
  %s0 = inlined_call_operand.hbm [shape: f32[16,32], index: 0, kind: input, shape index: {}]
  %s1 = inlined_call_operand.hbm [shape: f32[1,32], index: 1, kind: input, shape index: {}]
  %s2 = inlined_call_operand.vmem [shape: f32[1,32], index: 2, kind: input, shape index: {}]
  %s3 = inlined_call_operand.hbm [shape: f32[16,32], index: 3, kind: output, shape index: {}]
  %s4 = sld [smem:[#allocation0]]
  $region53: #{tpu_custom_call.1} parent=0
    _
  %s6 = ssub.s32 1, %s4
  %s7 = scalar_select 0, %s6, %s4
  $region1: #{tpu_custom_call.1} parent=0
    #allocation2 [shape = 'u8[8192]{0}', space=vmem, size = 0x2000, scoped, tag = 'input window, operand 0']
    #allocation3 [shape = 's32[2]{0}', space=sflag, size = 0x8, scoped, tag = 'scoped memory for tpu_custom_call.1']
    #allocation4 [shape = 's32[2]{0}', space=sflag, size = 0x8, scoped, tag = 'scoped memory for tpu_custom_call.1']
    #allocation5 [shape = 'u8[512]{0}', space=vmem, size = 0x400, scoped, tag = 'input window, operand 1, single buffered']
    #allocation6 [shape = 's32[1]{0}', space=sflag, size = 0x4, scoped, tag = 'scoped memory for tpu_custom_call.1']
    #allocation7 [shape = 'u8[8192]{0}', space=vmem, size = 0x2000, scoped, tag = 'output window, operand 0']
    %8 = vsyncpa [#allocation3], 0
    %s9 = scalar_lea.sflag [#allocation3], 1
    %10 = vsyncpa %s9, 0
    %11 = vsyncpa [#allocation6], 0
    %12 = vsyncpa [#allocation4], 0
    %s13 = scalar_lea.sflag [#allocation4], 1
    %14 = vsyncpa %s13, 0
    loop: start=0, step=1, limit=4
    $region2: #{tpu_custom_call.1} parent=1 // loop_pre_header
      _
    $region3: #{tpu_custom_call.1} parent=1 // loop_header
      %s16 = sphi 0, %s20
      %p17 = scmp.ge.s32.totalorder %s16, 4
      %s26 = sphi 0, %s28
      %s29 = sphi 0, %s26
      %s30 = sphi 0, %s29
      %s46 = sphi 0, %s30
      %s50 = sphi 0, %s50
      %s52 = sphi 0, %s50
      %s53 = sphi 0, %s52
      %s67 = sphi 0, %s53
      %s71 = sphi 0, %s71
      %s73 = sphi 0, %s71
      %s74 = sphi 0, %s73
      %s88 = sphi 0, %s74
      %s94 = sphi 0, %s96
      %s97 = sphi 0, %s94
      %s98 = sphi 0, %s97
      %s114 = sphi 0, %s98
    $region4: #{tpu_custom_call.1} parent=1 // loop_header_branch
      %19 = sbr.rel (%p17) target = $region8
    $region5: #{tpu_custom_call.1} parent=1 // loop_body
      %s21 = ssub.s32 %s16, 1
      %s22 = ssub.s32 %s16, 2
      %s23 = sadd.s32 %s16, 1
      %s24 = ssub.s32 %s16, %s23
      %p25 = scmp.eq.s32.totalorder %s24, 0
      %s27 = sadd.s32 %s26, 1
      %s28 = scalar_select %p25, %s26, %s27
      %p31 = pneg %p25
      %p32 = scmp.eq.s32.totalorder %s16, 1
      %p33 = por %p31, %p32
      %p34 = scmp.ne.s32.totalorder %s26, %s29
      %p35 = scmp.eq.s32.totalorder %s16, 0
      %p36 = por %p34, %p35
      %p37 = scmp.ne.s32.totalorder %s26, %s29
      %p38 = scmp.eq.s32.totalorder %s21, 1
      %p39 = por %p37, %p38
      %p40 = scmp.ne.s32.totalorder %s29, %s30
      %p41 = scmp.eq.s32.totalorder %s21, 0
      %p42 = por %p40, %p41
      %p43 = scmp.ne.s32.totalorder %s29, %s30
      %p44 = scmp.eq.s32.totalorder %s22, 1
      %p45 = por %p43, %p44
      %p47 = scmp.ne.s32.totalorder %s30, %s46
      %p48 = scmp.eq.s32.totalorder %s22, 0
      %p49 = por %p47, %p48
      %s51 = sadd.s32 %s50, 1
      %p54 = scmp.eq.s32.totalorder %s16, 1
      %p55 = scmp.ne.s32.totalorder %s50, %s52
      %p56 = scmp.eq.s32.totalorder %s16, 0
      %p57 = por %p55, %p56
      %p58 = scmp.ne.s32.totalorder %s50, %s52
      %p59 = scmp.eq.s32.totalorder %s21, 1
      %p60 = por %p58, %p59
      %p61 = scmp.ne.s32.totalorder %s52, %s53
      %p62 = scmp.eq.s32.totalorder %s21, 0
      %p63 = por %p61, %p62
      %p64 = scmp.ne.s32.totalorder %s52, %s53
      %p65 = scmp.eq.s32.totalorder %s22, 1
      %p66 = por %p64, %p65
      %p68 = scmp.ne.s32.totalorder %s53, %s67
      %p69 = scmp.eq.s32.totalorder %s22, 0
      %p70 = por %p68, %p69
      %s72 = sadd.s32 %s71, 1
      %p75 = scmp.eq.s32.totalorder %s16, 1
      %p76 = scmp.ne.s32.totalorder %s71, %s73
      %p77 = scmp.eq.s32.totalorder %s16, 0
      %p78 = por %p76, %p77
      %p79 = scmp.ne.s32.totalorder %s71, %s73
      %p80 = scmp.eq.s32.totalorder %s21, 1
      %p81 = por %p79, %p80
      %p82 = scmp.ne.s32.totalorder %s73, %s74
      %p83 = scmp.eq.s32.totalorder %s21, 0
      %p84 = por %p82, %p83
      %p85 = scmp.ne.s32.totalorder %s73, %s74
      %p86 = scmp.eq.s32.totalorder %s22, 1
      %p87 = por %p85, %p86
      %p89 = scmp.ne.s32.totalorder %s74, %s88
      %p90 = scmp.eq.s32.totalorder %s22, 0
      %p91 = por %p89, %p90
      %s92 = ssub.s32 %s16, %s23
      %p93 = scmp.eq.s32.totalorder %s92, 0
      %s95 = sadd.s32 %s94, 1
      %s96 = scalar_select %p93, %s94, %s95
      %p99 = pneg %p93
      %p100 = scmp.eq.s32.totalorder %s16, 1
      %p101 = por %p99, %p100
      %p102 = scmp.ne.s32.totalorder %s94, %s97
      %p103 = scmp.eq.s32.totalorder %s16, 0
      %p104 = por %p102, %p103
      %p105 = scmp.ne.s32.totalorder %s94, %s97
      %p106 = scmp.eq.s32.totalorder %s21, 1
      %p107 = por %p105, %p106
      %p108 = scmp.ne.s32.totalorder %s97, %s98
      %p109 = scmp.eq.s32.totalorder %s21, 0
      %p110 = por %p108, %p109
      %p111 = scmp.ne.s32.totalorder %s97, %s98
      %p112 = scmp.eq.s32.totalorder %s22, 1
      %p113 = por %p111, %p112
      %p115 = scmp.ne.s32.totalorder %s98, %s114
      %p116 = scmp.eq.s32.totalorder %s22, 0
      %p117 = por %p115, %p116
      %p118 = scmp.le.s32.totalorder 1, %s16
      %p119 = scmp.lt.s32.totalorder %s16, 3
      %p120 = pnand %p118, %p119
      %p121 = pneg %p120
      // Predicated region
      $region9: #{tpu_custom_call.1} parent=5 // pred_check
        _
      $region10: #{tpu_custom_call.1} parent=5 // pred_check_branch
        %123 = sbr.rel (%p120) target = $region12
      $region11: #{tpu_custom_call.1} parent=5 // pred_region
        %s124 = ssub.s32 %s16, 1
        // Predicated region
        $region13: #{tpu_custom_call.1} parent=11 // pred_check
          %p125 = pneg %p63
        $region14: #{tpu_custom_call.1} parent=11 // pred_check_branch
          %127 = sbr.rel (%p125) target = $region16
        $region15: #{tpu_custom_call.1} parent=11 // pred_region
          %129 = vsyncadd [#allocation6], 0
          %s131 = sshll.u32 %s1, 4
          %s132 = int_to_ptr.hbm [resolvable:$true] %s131
          %s133 = sshll.u32 [#allocation5], 4
          %s134 = int_to_ptr.vmem [resolvable:$true] %s133
          %136 = dma.hbm_to_vmem [thread:$0]  %s132, 16, %s134, [#allocation6]
        $region16: #{tpu_custom_call.1} parent=11 // pred_fallthru
          _
        // Predicated region
        $region17: #{tpu_custom_call.1} parent=11 // pred_check
          %p137 = pneg %p84
        $region18: #{tpu_custom_call.1} parent=11 // pred_check_branch
          %139 = sbr.rel (%p137) target = $region20
        $region19: #{tpu_custom_call.1} parent=11 // pred_region
          _
        $region20: #{tpu_custom_call.1} parent=11 // pred_fallthru
          _
      $region12: #{tpu_custom_call.1} parent=5 // pred_fallthru
        _
      %p140 = scmp.lt.s32.totalorder %s16, 2
      // Predicated region
      $region21: #{tpu_custom_call.1} parent=5 // pred_check
        %p141 = pneg %p140
      $region22: #{tpu_custom_call.1} parent=5 // pred_check_branch
        %143 = sbr.rel (%p141) target = $region24
      $region23: #{tpu_custom_call.1} parent=5 // pred_region
        // Predicated region
        $region25: #{tpu_custom_call.1} parent=23 // pred_check
          %p144 = pneg %p36
        $region26: #{tpu_custom_call.1} parent=23 // pred_check_branch
          %146 = sbr.rel (%p144) target = $region28
        $region27: #{tpu_custom_call.1} parent=23 // pred_region
          %s147 = sand.u32 %s26, 1
          %s148 = scalar_lea.sflag [#allocation3], %s147
          %s149 = sand.u32 %s26, 1
          %s150 = smul.addr %s149, 8
          %s151 = scalar_lea.vmem [#allocation2], %s150
          %153 = vsyncadd %s148, 0
          %s154 = smul.addr %s16, 8
          %s155 = scalar_lea.hbm %s0, %s154
          %s157 = sshll.u32 %s155, 4
          %s158 = int_to_ptr.hbm [resolvable:$true] %s157
          %s159 = sshll.u32 %s151, 4
          %s160 = int_to_ptr.vmem [resolvable:$true] %s159
          %162 = dma.hbm_to_vmem [thread:$0]  %s158, 128, %s160, %s148
        $region28: #{tpu_custom_call.1} parent=23 // pred_fallthru
          _
      $region24: #{tpu_custom_call.1} parent=5 // pred_fallthru
        _
      %p163 = scmp.le.s32.totalorder 1, %s16
      %p164 = scmp.lt.s32.totalorder %s16, 3
      %p165 = pnand %p163, %p164
      %p166 = pneg %p165
      // Predicated region
      $region29: #{tpu_custom_call.1} parent=5 // pred_check
        _
      $region30: #{tpu_custom_call.1} parent=5 // pred_check_branch
        %168 = sbr.rel (%p165) target = $region32
      $region31: #{tpu_custom_call.1} parent=5 // pred_region
        %s169 = ssub.s32 %s16, 1
        %s170 = sand.u32 %s29, 1
        %s171 = scalar_lea.sflag [#allocation3], %s170
        %s172 = sand.u32 %s29, 1
        %s173 = smul.addr %s172, 8
        %s174 = scalar_lea.vmem [#allocation2], %s173
        // Predicated region
        $region33: #{tpu_custom_call.1} parent=31 // pred_check
          %p175 = pneg %p42
        $region34: #{tpu_custom_call.1} parent=31 // pred_check_branch
          %177 = sbr.rel (%p175) target = $region36
        $region35: #{tpu_custom_call.1} parent=31 // pred_region
          %179 = dma.done %s171, 128
        $region36: #{tpu_custom_call.1} parent=31 // pred_fallthru
          _
        // Predicated region
        $region37: #{tpu_custom_call.1} parent=31 // pred_check
          %p180 = pneg %p63
        $region38: #{tpu_custom_call.1} parent=31 // pred_check_branch
          %182 = sbr.rel (%p180) target = $region40
        $region39: #{tpu_custom_call.1} parent=31 // pred_region
          %184 = dma.done [#allocation6], 16
        $region40: #{tpu_custom_call.1} parent=31 // pred_fallthru
          _
        %s185 = sand.u32 %s29, 1
        %s186 = scalar_lea.sflag [#allocation3], %s185
        %s187 = sand.u32 %s29, 1
        %s188 = smul.addr %s187, 8
        %s189 = scalar_lea.vmem [#allocation2], %s188
        %p190 = pneg %p42
        %p191 = pneg %p39
        %p192 = pneg %p63
        %p193 = pneg %p60
        %p194 = pneg %p84
        %p195 = pneg %p81
        %p196 = pneg %p110
        %p197 = pneg %p107
        %s198 = sand.u32 %s97, 1
        %s199 = scalar_lea.sflag [#allocation4], %s198
        %s200 = sand.u32 %s97, 1
        %s201 = smul.addr %s200, 8
        %s202 = scalar_lea.vmem [#allocation7], %s201
        %v203 = vld [vmem:[%s174] sm:$0xff]
        %vm204 = vcmask 261120
        %v205 = vsel %vm204, %v203, 0.0
        %206 = vadd.xlane.f32.xlu0 %v205
        %v207 = vpop.xlane.xlu0 %206
        %v208 = vrcp.pop 32.0
        %v209 = vmul.f32 32.0, %v208
        %v210 = vsub.f32 1.0, %v209
        %v211 = vmul.f32 %v208, %v210
        %v212 = vadd.f32 %v208, %v211
        %vm213 = vweird.f32 %v208
        %v214 = vsel %vm213, %v208, %v212
        %v215 = vmul.f32 %v207, %v214
        %v216 = vsub.f32 %v203, %v215
        %v217 = vmul.f32 %v216, %v216
        %v218 = vsel %vm204, %v217, 0.0
        %219 = vadd.xlane.f32.xlu0 %v218
        %v220 = vpop.xlane.xlu0 %219
        %v221 = vmul.f32 %v220, 0.032258064
        %v222 = vrsqrt.pop %v221
        %v223 = vmul.f32 %v222, %v221
        %v224 = vmul.f32 %v223, %v222
        %v225 = vmul.f32 0.5, %v224
        %v226 = vsub.f32 1.5, %v225
        %v227 = vmul.f32 %v222, %v226
        %v228 = vmul.f32 %v221, %v227
        %vm229 = vcmp.eq.f32.partialorder %v221, inf
        %v230 = vsel %vm229, %v221, %v228
        %vm231 = vcmp.eq.f32.partialorder %v221, 0.0
        %v232 = vand.u32 %v221, 2147483648
        %v233 = vsel %vm231, %v232, %v230
        %v234 = vld [vmem:[#allocation5] sm:$0x1]
        %v236 = vperm.slane %v234, 0
        %v238 = vmul.f32 %v236, %v216
        %v239 = vadd.f32 %v233, 1e-06
        %v240 = vld [vmem:[%s2] sm:$0x1]
        %v242 = vperm.slane %v240, 0
        %v244 = vadd.f32 %v239, %v242
        %v245 = vrcp.pop %v244
        %v246 = vmul.f32 %v244, %v245
        %v247 = vsub.f32 1.0, %v246
        %v248 = vmul.f32 %v245, %v247
        %v249 = vadd.f32 %v245, %v248
        %vm250 = vweird.f32 %v244
        %vm251 = vweird.f32 %v245
        %vm252 = vmor %vm250, %vm251
        %v253 = vsel %vm252, %v245, %v249
        %v254 = vand.u32 2147483647, %v244
        %vm255 = vcmp.eq.f32.partialorder %v254, 8.507059e+37
        %v256 = vand.u32 %v244, 2147483648
        %v257 = vor.u32 1.1754944e-38, %v256
        %v258 = vsel %vm255, %v257, %v253
        %v259 = vmul.f32 %v238, %v258
        %260 = vst.msk [vmem:[%s202] sm:$0xff] %vm204, %v259
        %s261 = sand.u32 %s97, 1
        %s262 = scalar_lea.sflag [#allocation4], %s261
        %s263 = sand.u32 %s97, 1
        %s264 = smul.addr %s263, 8
        %s265 = scalar_lea.vmem [#allocation7], %s264
        // Predicated region
        $region41: #{tpu_custom_call.1} parent=31 // pred_check
          %p266 = pneg %p107
        $region42: #{tpu_custom_call.1} parent=31 // pred_check_branch
          %268 = sbr.rel (%p266) target = $region44
        $region43: #{tpu_custom_call.1} parent=31 // pred_region
          %270 = vsyncadd %s262, 0
          %s271 = smul.addr %s21, 8
          %s272 = scalar_lea.hbm %s3, %s271
          %s274 = sshll.u32 %s265, 4
          %s275 = int_to_ptr.vmem [resolvable:$true] %s274
          %s276 = sshll.u32 %s272, 4
          %s277 = int_to_ptr.hbm [resolvable:$true] %s276
          %279 = dma.vmem_to_hbm [thread:$0]  %s275, 128, %s277, %s262
        $region44: #{tpu_custom_call.1} parent=31 // pred_fallthru
          _
      $region32: #{tpu_custom_call.1} parent=5 // pred_fallthru
        _
      %p280 = scmp.le.s32.totalorder 2, %s16
      // Predicated region
      $region45: #{tpu_custom_call.1} parent=5 // pred_check
        %p281 = pneg %p280
      $region46: #{tpu_custom_call.1} parent=5 // pred_check_branch
        %283 = sbr.rel (%p281) target = $region48
      $region47: #{tpu_custom_call.1} parent=5 // pred_region
        %s284 = ssub.s32 %s16, 2
        // Predicated region
        $region49: #{tpu_custom_call.1} parent=47 // pred_check
          %p285 = pneg %p113
        $region50: #{tpu_custom_call.1} parent=47 // pred_check_branch
          %287 = sbr.rel (%p285) target = $region52
        $region51: #{tpu_custom_call.1} parent=47 // pred_region
          %s288 = sand.u32 %s98, 1
          %s289 = scalar_lea.sflag [#allocation4], %s288
          %s290 = sand.u32 %s98, 1
          %s291 = smul.addr %s290, 8
          %s292 = scalar_lea.vmem [#allocation7], %s291
          %294 = dma.done %s289, 128
        $region52: #{tpu_custom_call.1} parent=47 // pred_fallthru
          _
      $region48: #{tpu_custom_call.1} parent=5 // pred_fallthru
        _
    $region6: #{tpu_custom_call.1} parent=1 // loop_footer
      %s20 = sadd.s32 1, %s16
    $region7: #{tpu_custom_call.1} parent=1 // loop_footer_branch
      %15 = sbr.rel target = $region3
    $region8: #{tpu_custom_call.1} parent=1 // loop_exit
      _
    %295 = vsyncpa [#allocation3], 1
    %s296 = scalar_lea.sflag [#allocation3], 1
    %297 = vsyncpa %s296, 1
    %298 = vsyncpa [#allocation6], 1
    %299 = vsyncpa [#allocation4], 1
    %s300 = scalar_lea.sflag [#allocation4], 1
    %301 = vsyncpa %s300, 1

</llo_original>
